<compile_context>
chip_gen: v7x
topology: tpu7x:2x2x1
jax: 0.10.0
libtpu: 0.0.40
codegen_flags: <defaults>
</compile_context>

<pallas_src>
import functools

import jax
import jax.numpy as jnp
from jax import lax
from jax.experimental import pallas as pl
from jax.experimental.pallas import tpu as pltpu

_MIB = 1024 * 1024

_SMALL_TABLE_BYTES = 4 * _MIB      # table resident in VMEM below this
_SMALL_TABLE_VOCAB = 2048          # bounds the one-hot VALU cost
_SMALL_PATH_BUDGET = 24 * _MIB     # working-set budget for TB selection
_MAX_DMA_TOKENS_PER_CALL = 32768   # bounds scalar-prefetch SMEM footprint


def _round_up(x, m):
    return ((x + m - 1) // m) * m


def _gather_precision(dtype):
    # bf16 (and narrower) tables: single-pass MXU matmul is already exact for
    # a one-hot gather -> default precision.  f32 tables: keep HIGHEST so the
    # gather matches the exact embedding lookup to ~1 ulp.
    if jnp.dtype(dtype) == jnp.dtype(jnp.float32):
        return lax.Precision.HIGHEST
    return None


def _pick_token_tile(num_tokens, max_tb):
    # Multiple of 16 (sublane-dense for f32 and bf16).  Ensure >=2 grid steps
    # for moderate token counts so a "parallel" token axis can split across
    # both v7x TensorCores.
    if num_tokens >= 2 * max_tb:
        return max_tb
    if num_tokens >= 32:
        return _round_up(pl.cdiv(num_tokens, 2), 16)
    return _round_up(max(num_tokens, 1), 16)


def _pick_small_tb(num_tokens, vocab, dim, dtype_bytes):
    max_tb = 128
    for cand in (512, 256, 128):
        work = (2 * vocab * dim * dtype_bytes     # table (double buffered)
                + 2 * cand * dim * dtype_bytes    # output tiles
                + cand * vocab * 4                # one-hot / compare temp
                + 2 * vocab * 4)                  # iota
        if work <= _SMALL_PATH_BUDGET:
            max_tb = cand
            break
    return _pick_token_tile(num_tokens, max_tb)


# ---------------------------------------------------------------------------
# Path A: small table resident in VMEM; gather = one_hot(ids) @ table on MXU.
# ---------------------------------------------------------------------------
def _embed_onehot_kernel(ids_ref, iota_ref, tbl_ref, out_ref, *, precision):
    # ids_ref : (TB, 1) int32 token ids for this tile.
    # iota_ref: (1, V)  int32 vocab iota (constant block, fetched once).
    # tbl_ref : (V, D)  full embedding table (constant block, VMEM resident).
    # out_ref : (TB, D) sublane/lane-dense output slab.
    one_hot = (ids_ref[...] == iota_ref[...]).astype(tbl_ref.dtype)   # (TB, V)
    out_ref[...] = jnp.dot(
        one_hot, tbl_ref[...],
        precision=precision,
        preferred_element_type=jnp.float32,
    ).astype(out_ref.dtype)


def _embed_small_table(flat_ids, table, tb):
    num_tokens = flat_ids.shape[0]
    vocab, dim = table.shape
    dtype_bytes = jnp.dtype(table.dtype).itemsize
    padded = _round_up(num_tokens, tb)
    ids_col = jnp.pad(flat_ids, (0, padded - num_tokens)).reshape(padded, 1)
    iota = jnp.arange(vocab, dtype=jnp.int32).reshape(1, vocab)

    work = (2 * vocab * dim * dtype_bytes + 2 * vocab * 4
            + 2 * tb * dim * dtype_bytes + 2 * tb * 4
            + tb * vocab * 4)
    vmem_limit = int(min(64 * _MIB, max(32 * _MIB, 2 * work)))

    cost = pl.CostEstimate(
        flops=2 * padded * vocab * dim,
        transcendentals=0,
        bytes_accessed=(padded * dim + vocab * dim) * dtype_bytes + padded * 4)
    kernel = functools.partial(
        _embed_onehot_kernel, precision=_gather_precision(table.dtype))

    out = pl.pallas_call(
        kernel,
        grid=(padded // tb,),
        in_specs=[
            pl.BlockSpec((tb, 1), lambda g: (g, 0)),        # ids column
            pl.BlockSpec((1, vocab), lambda g: (0, 0)),     # vocab iota (const)
            pl.BlockSpec((vocab, dim), lambda g: (0, 0)),   # whole table (const)
        ],
        out_specs=pl.BlockSpec((tb, dim), lambda g: (g, 0)),
        out_shape=jax.ShapeDtypeStruct((padded, dim), table.dtype),
        compiler_params=pltpu.CompilerParams(
            dimension_semantics=("parallel",),
            vmem_limit_bytes=vmem_limit),
        cost_estimate=cost,
    )(ids_col, iota, table)
    return out[:num_tokens]


# ---------------------------------------------------------------------------
# Path B: medium/large table, tokens >> vocab.  Stream the table through VMEM
# in (VC, D) chunks (auto-pipelined, sequential HBM reads at full bandwidth)
# and accumulate one_hot(ids in chunk) @ chunk into a (TB, D) accumulator.
# ---------------------------------------------------------------------------
def _embed_stream_kernel(ids_ref, iota_ref, tbl_ref, out_ref, acc_ref, *,
                         precision):
    c = pl.program_id(1)

    @pl.when(c == 0)
    def _():
        acc_ref[...] = jnp.zeros_like(acc_ref)

    one_hot = (ids_ref[...] == iota_ref[...]).astype(tbl_ref.dtype)   # (TB, VC)
    acc_ref[...] += jnp.dot(one_hot, tbl_ref[...],
                            precision=precision,
                            preferred_element_type=jnp.float32)

    @pl.when(c == pl.num_programs(1) - 1)
    def _():
        out_ref[...] = acc_ref[...].astype(out_ref.dtype)


def _embed_stream_table(flat_ids, table, tb):
    num_tokens = flat_ids.shape[0]
    vocab, dim = table.shape
    dtype_bytes = jnp.dtype(table.dtype).itemsize

    # Vocab chunk: multiple of 128 (lane-dense iota, sublane-dense table),
    # sized so two double-buffered table chunks stay <= ~8 MiB.
    vc = 128
    for cand in (512, 256, 128):
        if 2 * cand * dim * dtype_bytes <= 8 * _MIB:
            vc = cand
            break

    vocab_pad = _round_up(vocab, vc)
    padded = _round_up(num_tokens, tb)
    ids_col = jnp.pad(flat_ids, (0, padded - num_tokens)).reshape(padded, 1)
    iota = jnp.arange(vocab_pad, dtype=jnp.int32).reshape(1, vocab_pad)
    tbl = jnp.pad(table, ((0, vocab_pad - vocab), (0, 0)))  # pad rows unselected

    work = (2 * vc * dim * dtype_bytes + 2 * vc * 4
            + 2 * tb * dim * dtype_bytes + 2 * tb * 4
            + tb * dim * 4 + tb * vc * 4)
    vmem_limit = int(min(64 * _MIB, max(32 * _MIB, 2 * work)))

    n_tiles = padded // tb
    n_chunks = vocab_pad // vc
    cost = pl.CostEstimate(
        flops=2 * padded * vocab_pad * dim,
        transcendentals=0,
        bytes_accessed=(n_tiles * vocab_pad * dim + padded * dim) * dtype_bytes
                       + padded * 4)
    kernel = functools.partial(
        _embed_stream_kernel, precision=_gather_precision(table.dtype))

    out = pl.pallas_call(
        kernel,
        grid=(n_tiles, n_chunks),
        in_specs=[
            pl.BlockSpec((tb, 1), lambda g, c: (g, 0)),     # ids column
            pl.BlockSpec((1, vc), lambda g, c: (0, c)),     # iota chunk
            pl.BlockSpec((vc, dim), lambda g, c: (c, 0)),   # table chunk
        ],
        out_specs=pl.BlockSpec((tb, dim), lambda g, c: (g, 0)),
        out_shape=jax.ShapeDtypeStruct((padded, dim), table.dtype),
        scratch_shapes=[pltpu.VMEM((tb, dim), jnp.float32)],
        compiler_params=pltpu.CompilerParams(
            dimension_semantics=("parallel", "arbitrary"),
            vmem_limit_bytes=vmem_limit),
        cost_estimate=cost,
    )(ids_col, iota, tbl)
    return out[:num_tokens]


# ---------------------------------------------------------------------------
# Path C: large table, few tokens.  Table stays in HBM; batched per-row DMA
# gather with NFLIGHT copies in flight, straight into the (TB, D) output tile.
# ---------------------------------------------------------------------------
def _make_dma_gather_kernel(tb, nflight):
    def kernel(ids_ref, tbl_hbm, out_ref, sems):
        # ids_ref: SMEM scalar-prefetched flat token ids.
        # tbl_hbm: (V, D) embedding table, raw HBM ref (memory_space=pl.ANY).
        # out_ref: (TB, D) output VMEM tile for this grid step.
        # sems:    (NFLIGHT,) DMA semaphores.
        base = pl.program_id(0) * tb

        def start_copy(t, slot, row):
            pltpu.make_async_copy(
                tbl_hbm.at[row], out_ref.at[t], sems.at[slot]).start()

        def wait_copy(t, slot):
            # Descriptor only sizes the wait; shapes match the started copy.
            pltpu.make_async_copy(
                tbl_hbm.at[0], out_ref.at[t], sems.at[slot]).wait()

        # Prime: static trip count -> fully unrolled.
        for t in range(nflight):
            start_copy(t, t, ids_ref[base + t])

        # Steady state: read the next row id from SMEM *before* the wait
        # (the wait breaks SMEM store->load forwarding).
        if tb > nflight:
            @pl.loop(nflight, tb)
            def _steady(t):
                slot = lax.rem(t, nflight)
                row = ids_ref[base + t]
                wait_copy(t - nflight, slot)
                start_copy(t, slot, row)

        # Drain: static trip count -> fully unrolled.
        for t in range(tb - nflight, tb):
            wait_copy(t, t % nflight)

    return kernel


def _embed_dma_gather(flat_ids, table, tb, nflight=16):
    num_tokens = flat_ids.shape[0]
    vocab, dim = table.shape
    dtype_bytes = jnp.dtype(table.dtype).itemsize

    # Keep the double-buffered (TB, D) output tiles under ~16 MiB.
    while tb > 16 and 2 * tb * dim * dtype_bytes > 16 * _MIB:
        tb //= 2
    tb = max(16, (tb // 16) * 16)
    nflight = min(nflight, tb)

    padded = _round_up(num_tokens, tb)
    ids = jnp.pad(flat_ids, (0, padded - num_tokens))
    vmem_limit = int(min(64 * _MIB,
                         max(32 * _MIB, 4 * tb * dim * dtype_bytes)))

    def one_call(ids_chunk):
        n = ids_chunk.shape[0]
        cost = pl.CostEstimate(
            flops=0, transcendentals=0,
            bytes_accessed=2 * n * dim * dtype_bytes + n * 4)
        grid_spec = pltpu.PrefetchScalarGridSpec(
            num_scalar_prefetch=1,
            grid=(n // tb,),
            in_specs=[pl.BlockSpec(memory_space=pl.ANY)],     # table in HBM
            out_specs=pl.BlockSpec((tb, dim), lambda g, ids_ref: (g, 0)),
            scratch_shapes=[pltpu.SemaphoreType.DMA((nflight,))],
        )
        return pl.pallas_call(
            _make_dma_gather_kernel(tb, nflight),
            grid_spec=grid_spec,
            out_shape=jax.ShapeDtypeStruct((n, dim), table.dtype),
            compiler_params=pltpu.CompilerParams(
                dimension_semantics=("parallel",),
                vmem_limit_bytes=vmem_limit),
            cost_estimate=cost,
        )(ids_chunk, table)

    # Bound the scalar-prefetch SMEM footprint (1-D SMEM pads to
    # next_pow2(4*N) bytes): chunk very long sequences into separate calls.
    if padded <= _MAX_DMA_TOKENS_PER_CALL:
        out = one_call(ids)
    else:
        out = jnp.concatenate(
            [one_call(ids[s:s + _MAX_DMA_TOKENS_PER_CALL])
             for s in range(0, padded, _MAX_DMA_TOKENS_PER_CALL)], axis=0)
    return out[:num_tokens]


# ---------------------------------------------------------------------------
# Wrapper: nn.Embedding(vocab, dim)(indices)
# ---------------------------------------------------------------------------
def word_embedding_forward(indices, embedding_table, *, force_path=None):
    """Equivalent of nn.Embedding(vocab, dim)(indices)."""
    vocab, dim = embedding_table.shape
    orig_shape = indices.shape
    flat = indices.reshape(-1).astype(jnp.int32)
    num_tokens = int(flat.shape[0])
    if num_tokens == 0:
        return jnp.zeros(orig_shape + (dim,), embedding_table.dtype)

    # nn.Embedding errors on out-of-range ids; clamp so the data-dependent
    # gather never issues an out-of-bounds HBM DMA (undefined behavior).
    flat = jnp.clip(flat, 0, vocab - 1)

    dtype_bytes = jnp.dtype(embedding_table.dtype).itemsize
    table_bytes = vocab * dim * dtype_bytes
    small_ok = (table_bytes <= _SMALL_TABLE_BYTES
                and vocab <= _SMALL_TABLE_VOCAB)
    stream_ok = num_tokens >= 4 * vocab          # tokens >> vocab

    if force_path in ("vmem", "stream", "dma"):
        path = force_path
    elif small_ok:
        path = "vmem"
    elif stream_ok:
        path = "stream"
    else:
        path = "dma"

    if path == "vmem":
        tb = _pick_small_tb(num_tokens, vocab, dim, dtype_bytes)
        out = _embed_small_table(flat, embedding_table, tb)
    elif path == "stream":
        tb = _pick_token_tile(num_tokens, 256)
        out = _embed_stream_table(flat, embedding_table, tb)
    else:
        tb = _pick_token_tile(num_tokens, 256)
        out = _embed_dma_gather(flat, embedding_table, tb)
    return out.reshape(orig_shape + (dim,))


if __name__ == "__main__":
    key = jax.random.PRNGKey(0)
    k_emb, k_idx = jax.random.split(key)

    vocab_size = 128
    embedding_dim = 128
    batch, seq = 2, 8

    # Deterministic "checkpoint": nn.Embedding default init is N(0, 1).
    embedding_table = jax.random.normal(
        k_emb, (vocab_size, embedding_dim), dtype=jnp.float32)
    input_ids = jax.random.randint(
        k_idx, (batch, seq), minval=0, maxval=vocab_size, dtype=jnp.int32)

    ref = embedding_table[input_ids]

    # Default path at this size: table resident in VMEM, one-hot MXU gather.
    out = jax.block_until_ready(
        word_embedding_forward(input_ids, embedding_table))
    assert out.shape == (batch, seq, embedding_dim)
    assert out.dtype == jnp.float32
    assert jnp.allclose(out, ref, rtol=1e-5, atol=1e-5), \
        "mismatch vs. reference (VMEM-resident path)"

    # Table-streaming path (vocab-chunked, accumulator), exercised explicitly.
    out_stream = jax.block_until_ready(
        word_embedding_forward(input_ids, embedding_table, force_path="stream"))
    assert jnp.allclose(out_stream, ref, rtol=1e-5, atol=1e-5), \
        "mismatch vs. reference (table-streaming path)"

    # Large-table path (batched manual row DMAs) — exact gather.
    out_dma = jax.block_until_ready(
        word_embedding_forward(input_ids, embedding_table, force_path="dma"))
    assert jnp.array_equal(out_dma, ref), \
        "mismatch vs. reference (DMA-gather path)"

    # bf16 table exercises the default-precision MXU branch (exact gather).
    table_bf16 = embedding_table.astype(jnp.bfloat16)
    out_bf16 = jax.block_until_ready(
        word_embedding_forward(input_ids, table_bf16, force_path="vmem"))
    assert out_bf16.dtype == jnp.bfloat16
    assert jnp.array_equal(out_bf16, table_bf16[input_ids]), \
        "mismatch vs. reference (bf16 VMEM-resident path)"

    print("KERNEL_OK")
</pallas_src>

<mosaic_0001>
module attributes {stable_mosaic.version = 11 : i64} {
  func.func @_embed_onehot_kernel(%arg0: i32, %arg1: memref<16x1xi32, #tpu.memory_space<vmem>>, %arg2: memref<1x128xi32, #tpu.memory_space<vmem>>, %arg3: memref<128x128xf32, #tpu.memory_space<vmem>>, %arg4: memref<16x128xf32, #tpu.memory_space<vmem>>) attributes {dimension_semantics = [#tpu.dimension_semantics<parallel>], iteration_bounds = array<i64: 1>, scalar_prefetch = 0 : i64, scratch_operands = 0 : i64, tpu.core_type = #tpu.core_type<tc>, window_params = [{transform_indices = @transform_0, window_bounds = array<i64: 16, 1>}, {pipeline_mode = #tpu.pipeline_mode<synchronous>, transform_indices = @transform_1, window_bounds = array<i64: 1, 128>}, {pipeline_mode = #tpu.pipeline_mode<synchronous>, transform_indices = @transform_2, window_bounds = array<i64: 128, 128>}, {transform_indices = @transform_3, window_bounds = array<i64: 16, 128>}]} {
    %c0 = arith.constant 0 : index
    %c0_0 = arith.constant 0 : index
    %0 = vector.load %arg1[%c0, %c0_0] : memref<16x1xi32, #tpu.memory_space<vmem>>, vector<16x1xi32>
    %c0_1 = arith.constant 0 : index
    %c0_2 = arith.constant 0 : index
    %1 = vector.load %arg2[%c0_1, %c0_2] : memref<1x128xi32, #tpu.memory_space<vmem>>, vector<1x128xi32>
    %2 = vector.broadcast %0 : vector<16x1xi32> to vector<16x128xi32>
    %3 = vector.broadcast %1 : vector<1x128xi32> to vector<16x128xi32>
    %4 = arith.cmpi eq, %2, %3 : vector<16x128xi32>
    %5 = arith.extui %4 : vector<16x128xi1> to vector<16x128xi32>
    %6 = arith.sitofp %5 : vector<16x128xi32> to vector<16x128xf32>
    %c0_3 = arith.constant 0 : index
    %c0_4 = arith.constant 0 : index
    %7 = vector.load %arg3[%c0_3, %c0_4] : memref<128x128xf32, #tpu.memory_space<vmem>>, vector<128x128xf32>
    %cst = arith.constant dense<0.000000e+00> : vector<16x128xf32>
    %8 = tpu.matmul %6, %7, %cst {dimension_numbers = #tpu.dot_dimension_numbers<[1], [0], [0], [1], [0, 0, 1, 1], [], []>, precision = #tpu.contract_precision<fp32>} : vector<16x128xf32>, vector<128x128xf32>, vector<16x128xf32> -> vector<16x128xf32>
    %c0_5 = arith.constant 0 : index
    %c0_6 = arith.constant 0 : index
    %9 = vector.load %arg4[%c0_5, %c0_6] : memref<16x128xf32, #tpu.memory_space<vmem>>, vector<16x128xf32>
    tpu.vector_store %arg4[%c0_5, %c0_6], %8 {strides = array<i32>} : memref<16x128xf32, #tpu.memory_space<vmem>>, vector<16x128xf32>,
    return
  }
  func.func @transform_0(%arg0: i32) -> (i32, i32) {
    %c0_i32 = arith.constant 0 : i32
    %c0_i32_0 = arith.constant 0 : i32
    return %arg0, %c0_i32 : i32, i32
  }
  func.func @transform_1(%arg0: i32) -> (i32, i32) {
    %c0_i32 = arith.constant 0 : i32
    %c0_i32_0 = arith.constant 0 : i32
    %c0_i32_1 = arith.constant 0 : i32
    return %c0_i32, %c0_i32_0 : i32, i32
  }
  func.func @transform_2(%arg0: i32) -> (i32, i32) {
    %c0_i32 = arith.constant 0 : i32
    %c0_i32_0 = arith.constant 0 : i32
    %c0_i32_1 = arith.constant 0 : i32
    return %c0_i32, %c0_i32_0 : i32, i32
  }
  func.func @transform_3(%arg0: i32) -> (i32, i32) {
    %c0_i32 = arith.constant 0 : i32
    %c0_i32_0 = arith.constant 0 : i32
    return %arg0, %c0_i32 : i32, i32
  }
}

</mosaic_0001>

<llo_original>
// kernel: tpu_custom_call.1
$region0: #{tpu_custom_call.1}
  #allocation0 [shape = 'u32[]', space=smem, size = 0x4, offset = 0x4, fixed_abs, tag = 'smem constant byte address 0x4 - core index']
  #allocation1 [shape = 'u32[144,128]{1,0:T(1,128)}', space=vmem, size = 0x12000, scoped, tag = 'internal scratch']
  %s0 = inlined_call_operand.vmem [shape: s32[16,1], index: 0, kind: input, shape index: {}]
  %s1 = inlined_call_operand.vmem [shape: s32[1,128], index: 1, kind: input, shape index: {}]
  %s2 = inlined_call_operand.hbm [shape: f32[128,128], index: 2, kind: input, shape index: {}]
  %s3 = inlined_call_operand.hbm [shape: f32[16,128], index: 3, kind: output, shape index: {}]
  %s4 = sld [smem:[#allocation0]]
  $region26: #{tpu_custom_call.1} parent=0
    _
  %s6 = ssub.s32 1, %s4
  %s7 = scalar_select 0, %s6, %s4
  $region1: #{tpu_custom_call.1} parent=0
    #allocation2 [shape = 'u8[65536]{0}', space=vmem, size = 0x10000, scoped, tag = 'input window, operand 2, single buffered']
    #allocation3 [shape = 's32[1]{0}', space=sflag, size = 0x4, scoped, tag = 'scoped memory for tpu_custom_call.1']
    #allocation4 [shape = 's32[1]{0}', space=sflag, size = 0x4, scoped, tag = 'scoped memory for tpu_custom_call.1']
    #allocation5 [shape = 'u8[8192]{0}', space=vmem, size = 0x2000, scoped, tag = 'output window, operand 0, single buffered']
    %8 = vsyncpa [#allocation3], 0
    %9 = vsyncpa [#allocation4], 0
    // Predicated region
    $region2: #{tpu_custom_call.1} parent=1 // pred_check
      _
    $region3: #{tpu_custom_call.1} parent=1 // pred_check_branch
      %11 = sbr.rel (0) target = $region5
    $region4: #{tpu_custom_call.1} parent=1 // pred_region
      _
    $region5: #{tpu_custom_call.1} parent=1 // pred_fallthru
      _
    // Predicated region
    $region6: #{tpu_custom_call.1} parent=1 // pred_check
      _
    $region7: #{tpu_custom_call.1} parent=1 // pred_check_branch
      %13 = sbr.rel (0) target = $region9
    $region8: #{tpu_custom_call.1} parent=1 // pred_region
      _
    $region9: #{tpu_custom_call.1} parent=1 // pred_fallthru
      _
    // Predicated region
    $region10: #{tpu_custom_call.1} parent=1 // pred_check
      _
    $region11: #{tpu_custom_call.1} parent=1 // pred_check_branch
      %15 = sbr.rel (0) target = $region13
    $region12: #{tpu_custom_call.1} parent=1 // pred_region
      %s17 = ssub.s32 2048, 2048
      %18 = vsyncadd [#allocation3], %s17
      %s19 = sshll.u32 [#allocation2], 4
      %s20 = int_to_ptr.vmem [resolvable:$true] %s19
      %25 = dma.hbm_to_vmem [thread:$0]  %s2, 2048, %s20, [#allocation3], 128, 128, 8
    $region13: #{tpu_custom_call.1} parent=1 // pred_fallthru
      _
    // Predicated region
    $region14: #{tpu_custom_call.1} parent=1 // pred_check
      _
    $region15: #{tpu_custom_call.1} parent=1 // pred_check_branch
      %27 = sbr.rel (0) target = $region17
    $region16: #{tpu_custom_call.1} parent=1 // pred_region
      %28 = dma.done [#allocation3], 2048
    $region17: #{tpu_custom_call.1} parent=1 // pred_fallthru
      _
    %v29 = vld [vmem:[%s0] sm:$0xff]
    %v30 = vld [vmem:[%s0 + $0x8] sm:$0xff]
    %v31 = vld [vmem:[%s1] sm:$0x1]
    %32 = vset.pattern.permute.xlu0 0
    %33 = vperm.xlu0 %32, %v29
    %v34 = vpop.permute.xlu0 %33
    %35 = vset.pattern.permute.xlu0 0
    %36 = vperm.xlu0 %35, %v30
    %v37 = vpop.permute.xlu0 %36
    %v38 = vlaneseq
    %v39 = vshrl.u32 %v38, 7
    %v40 = vsub.s32 0, %v39
    %v41 = vrot.slane %v31, %v40
    %vm42 = vcmp.eq.s32.totalorder %v34, %v41
    %vm43 = vcmp.eq.s32.totalorder %v37, %v41
    %v44 = vsel %vm42, 1, 0
    %v45 = vsel %vm43, 1, 0
    %v46 = vcvt.s32.f32 %v44
    %v47 = vcvt.s32.f32 %v45
    %v48 = vld [vmem:[#allocation2] sm:$0xff]
    %v49 = vld [vmem:[#allocation2 + $0x8] sm:$0xff]
    %v50 = vld [vmem:[#allocation2 + $0x10] sm:$0xff]
    %v51 = vld [vmem:[#allocation2 + $0x18] sm:$0xff]
    %v52 = vld [vmem:[#allocation2 + $0x20] sm:$0xff]
    %v53 = vld [vmem:[#allocation2 + $0x28] sm:$0xff]
    %v54 = vld [vmem:[#allocation2 + $0x30] sm:$0xff]
    %v55 = vld [vmem:[#allocation2 + $0x38] sm:$0xff]
    %v56 = vld [vmem:[#allocation2 + $0x40] sm:$0xff]
    %v57 = vld [vmem:[#allocation2 + $0x48] sm:$0xff]
    %v58 = vld [vmem:[#allocation2 + $0x50] sm:$0xff]
    %v59 = vld [vmem:[#allocation2 + $0x58] sm:$0xff]
    %v60 = vld [vmem:[#allocation2 + $0x60] sm:$0xff]
    %v61 = vld [vmem:[#allocation2 + $0x68] sm:$0xff]
    %v62 = vld [vmem:[#allocation2 + $0x70] sm:$0xff]
    %v63 = vld [vmem:[#allocation2 + $0x78] sm:$0xff]
    %64 = vmatprep.subr.mxu0 0.0
    %v65 = vand.u32 %v48, 4294901760
    %66 = vmatpush1.msra.mxu0 %v65
    %67 = vmatprep.subr.mxu0 0.0
    %v68 = vand.u32 %v49, 4294901760
    %69 = vmatpush1.msra.mxu0 %v68
    %70 = vmatprep.subr.mxu0 0.0
    %v71 = vand.u32 %v50, 4294901760
    %72 = vmatpush1.msra.mxu0 %v71
    %73 = vmatprep.subr.mxu0 0.0
    %v74 = vand.u32 %v51, 4294901760
    %75 = vmatpush1.msra.mxu0 %v74
    %76 = vmatprep.subr.mxu0 0.0
    %v77 = vand.u32 %v52, 4294901760
    %78 = vmatpush1.msra.mxu0 %v77
    %79 = vmatprep.subr.mxu0 0.0
    %v80 = vand.u32 %v53, 4294901760
    %81 = vmatpush1.msra.mxu0 %v80
    %82 = vmatprep.subr.mxu0 0.0
    %v83 = vand.u32 %v54, 4294901760
    %84 = vmatpush1.msra.mxu0 %v83
    %85 = vmatprep.subr.mxu0 0.0
    %v86 = vand.u32 %v55, 4294901760
    %87 = vmatpush1.msra.mxu0 %v86
    %88 = vmatprep.subr.mxu0 0.0
    %v89 = vand.u32 %v56, 4294901760
    %90 = vmatpush1.msra.mxu0 %v89
    %91 = vmatprep.subr.mxu0 0.0
    %v92 = vand.u32 %v57, 4294901760
    %93 = vmatpush1.msra.mxu0 %v92
    %94 = vmatprep.subr.mxu0 0.0
    %v95 = vand.u32 %v58, 4294901760
    %96 = vmatpush1.msra.mxu0 %v95
    %97 = vmatprep.subr.mxu0 0.0
    %v98 = vand.u32 %v59, 4294901760
    %99 = vmatpush1.msra.mxu0 %v98
    %100 = vmatprep.subr.mxu0 0.0
    %v101 = vand.u32 %v60, 4294901760
    %102 = vmatpush1.msra.mxu0 %v101
    %103 = vmatprep.subr.mxu0 0.0
    %v104 = vand.u32 %v61, 4294901760
    %105 = vmatpush1.msra.mxu0 %v104
    %106 = vmatprep.subr.mxu0 0.0
    %v107 = vand.u32 %v62, 4294901760
    %108 = vmatpush1.msra.mxu0 %v107
    %109 = vmatprep.subr.mxu0 0.0
    %v110 = vand.u32 %v63, 4294901760
    %111 = vmatpush1.msra.mxu0 %v110
    %112 = vmatprep.subr.mxu0 0.0
    %113 = vmatpush1.msra.mxu0 0.0
    %114 = vmatprep.subr.mxu0 0.0
    %115 = vmatpush1.msra.mxu0 0.0
    %116 = vmatprep.subr.mxu0 0.0
    %117 = vmatpush1.msra.mxu0 0.0
    %118 = vmatprep.subr.mxu0 0.0
    %119 = vmatpush1.msra.mxu0 0.0
    %120 = vmatprep.subr.mxu0 0.0
    %121 = vmatpush1.msra.mxu0 0.0
    %122 = vmatprep.subr.mxu0 0.0
    %123 = vmatpush1.msra.mxu0 0.0
    %124 = vmatprep.subr.mxu0 0.0
    %125 = vmatpush1.msra.mxu0 0.0
    %126 = vmatprep.subr.mxu0 0.0
    %127 = vmatpush1.msra.mxu0 0.0
    %128 = vmatprep.subr.mxu0 0.0
    %129 = vmatpush1.msra.mxu0 0.0
    %130 = vmatprep.subr.mxu0 0.0
    %131 = vmatpush1.msra.mxu0 0.0
    %132 = vmatprep.subr.mxu0 0.0
    %133 = vmatpush1.msra.mxu0 0.0
    %134 = vmatprep.subr.mxu0 0.0
    %135 = vmatpush1.msra.mxu0 0.0
    %136 = vmatprep.subr.mxu0 0.0
    %137 = vmatpush1.msra.mxu0 0.0
    %138 = vmatprep.subr.mxu0 0.0
    %139 = vmatpush1.msra.mxu0 0.0
    %140 = vmatprep.subr.mxu0 0.0
    %141 = vmatpush1.msra.mxu0 0.0
    %142 = vmatprep.subr.mxu0 0.0
    %143 = vmatpush1.msra.mxu0 0.0
    %144 = vmatprep.mubr.f32.mxu0 0.0
    %v145 = vand.u32 %v46, 4294901760
    %v146 = vsub.f32 %v46, %v145
    %v147 = vand.u32 %v146, 4294901760
    %v148 = vsub.f32 %v146, %v147
    %v149 = vand.u32 %v148, 4294901760
    %150 = vmatmul.mubr.f32.gmra.mrb[0].mxu0 %v149
    %v151 = vpop.f32.mrb[0].mxu0
    %v152 = vadd.f32 0.0, %v151
    %v153 = vpop.f32.mrb[0].mxu0
    %154 = vmatprep.mubr.f32.mxu0 0.0
    %v155 = vand.u32 %v47, 4294901760
    %v156 = vsub.f32 %v47, %v155
    %v157 = vand.u32 %v156, 4294901760
    %v158 = vsub.f32 %v156, %v157
    %v159 = vand.u32 %v158, 4294901760
    %160 = vmatmul.mubr.f32.gmra.mrb[0].mxu0 %v159
    %v161 = vpop.f32.mrb[0].mxu0
    %v162 = vadd.f32 0.0, %v161
    %v163 = vpop.f32.mrb[0].mxu0
    %164 = vdwg.mxu0
    %165 = vmatprep.subr.mxu0 0.0
    %v166 = vand.u32 %v48, 4294901760
    %v167 = vsub.f32 %v48, %v166
    %v168 = vand.u32 %v167, 4294901760
    %v169 = vsub.f32 %v167, %v168
    %v170 = vand.u32 %v169, 4294901760
    %171 = vmatpush1.msra.mxu0 %v170
    %172 = vmatprep.subr.mxu0 0.0
    %v173 = vand.u32 %v49, 4294901760
    %v174 = vsub.f32 %v49, %v173
    %v175 = vand.u32 %v174, 4294901760
    %v176 = vsub.f32 %v174, %v175
    %v177 = vand.u32 %v176, 4294901760
    %178 = vmatpush1.msra.mxu0 %v177
    %179 = vmatprep.subr.mxu0 0.0
    %v180 = vand.u32 %v50, 4294901760
    %v181 = vsub.f32 %v50, %v180
    %v182 = vand.u32 %v181, 4294901760
    %v183 = vsub.f32 %v181, %v182
    %v184 = vand.u32 %v183, 4294901760
    %185 = vmatpush1.msra.mxu0 %v184
    %186 = vmatprep.subr.mxu0 0.0
    %v187 = vand.u32 %v51, 4294901760
    %v188 = vsub.f32 %v51, %v187
    %v189 = vand.u32 %v188, 4294901760
    %v190 = vsub.f32 %v188, %v189
    %v191 = vand.u32 %v190, 4294901760
    %192 = vmatpush1.msra.mxu0 %v191
    %193 = vmatprep.subr.mxu0 0.0
    %v194 = vand.u32 %v52, 4294901760
    %v195 = vsub.f32 %v52, %v194
    %v196 = vand.u32 %v195, 4294901760
    %v197 = vsub.f32 %v195, %v196
    %v198 = vand.u32 %v197, 4294901760
    %199 = vmatpush1.msra.mxu0 %v198
    %200 = vmatprep.subr.mxu0 0.0
    %v201 = vand.u32 %v53, 4294901760
    %v202 = vsub.f32 %v53, %v201
    %v203 = vand.u32 %v202, 4294901760
    %v204 = vsub.f32 %v202, %v203
    %v205 = vand.u32 %v204, 4294901760
    %206 = vmatpush1.msra.mxu0 %v205
    %207 = vmatprep.subr.mxu0 0.0
    %v208 = vand.u32 %v54, 4294901760
    %v209 = vsub.f32 %v54, %v208
    %v210 = vand.u32 %v209, 4294901760
    %v211 = vsub.f32 %v209, %v210
    %v212 = vand.u32 %v211, 4294901760
    %213 = vmatpush1.msra.mxu0 %v212
    %214 = vmatprep.subr.mxu0 0.0
    %v215 = vand.u32 %v55, 4294901760
    %v216 = vsub.f32 %v55, %v215
    %v217 = vand.u32 %v216, 4294901760
    %v218 = vsub.f32 %v216, %v217
    %v219 = vand.u32 %v218, 4294901760
    %220 = vmatpush1.msra.mxu0 %v219
    %221 = vmatprep.subr.mxu0 0.0
    %v222 = vand.u32 %v56, 4294901760
    %v223 = vsub.f32 %v56, %v222
    %v224 = vand.u32 %v223, 4294901760
    %v225 = vsub.f32 %v223, %v224
    %v226 = vand.u32 %v225, 4294901760
    %227 = vmatpush1.msra.mxu0 %v226
    %228 = vmatprep.subr.mxu0 0.0
    %v229 = vand.u32 %v57, 4294901760
    %v230 = vsub.f32 %v57, %v229
    %v231 = vand.u32 %v230, 4294901760
    %v232 = vsub.f32 %v230, %v231
    %v233 = vand.u32 %v232, 4294901760
    %234 = vmatpush1.msra.mxu0 %v233
    %235 = vmatprep.subr.mxu0 0.0
    %v236 = vand.u32 %v58, 4294901760
    %v237 = vsub.f32 %v58, %v236
    %v238 = vand.u32 %v237, 4294901760
    %v239 = vsub.f32 %v237, %v238
    %v240 = vand.u32 %v239, 4294901760
    %241 = vmatpush1.msra.mxu0 %v240
    %242 = vmatprep.subr.mxu0 0.0
    %v243 = vand.u32 %v59, 4294901760
    %v244 = vsub.f32 %v59, %v243
    %v245 = vand.u32 %v244, 4294901760
    %v246 = vsub.f32 %v244, %v245
    %v247 = vand.u32 %v246, 4294901760
    %248 = vmatpush1.msra.mxu0 %v247
    %249 = vmatprep.subr.mxu0 0.0
    %v250 = vand.u32 %v60, 4294901760
    %v251 = vsub.f32 %v60, %v250
    %v252 = vand.u32 %v251, 4294901760
    %v253 = vsub.f32 %v251, %v252
    %v254 = vand.u32 %v253, 4294901760
    %255 = vmatpush1.msra.mxu0 %v254
    %256 = vmatprep.subr.mxu0 0.0
    %v257 = vand.u32 %v61, 4294901760
    %v258 = vsub.f32 %v61, %v257
    %v259 = vand.u32 %v258, 4294901760
    %v260 = vsub.f32 %v258, %v259
    %v261 = vand.u32 %v260, 4294901760
    %262 = vmatpush1.msra.mxu0 %v261
    %263 = vmatprep.subr.mxu0 0.0
    %v264 = vand.u32 %v62, 4294901760
    %v265 = vsub.f32 %v62, %v264
    %v266 = vand.u32 %v265, 4294901760
    %v267 = vsub.f32 %v265, %v266
    %v268 = vand.u32 %v267, 4294901760
    %269 = vmatpush1.msra.mxu0 %v268
    %270 = vmatprep.subr.mxu0 0.0
    %v271 = vand.u32 %v63, 4294901760
    %v272 = vsub.f32 %v63, %v271
    %v273 = vand.u32 %v272, 4294901760
    %v274 = vsub.f32 %v272, %v273
    %v275 = vand.u32 %v274, 4294901760
    %276 = vmatpush1.msra.mxu0 %v275
    %277 = vmatprep.subr.mxu0 0.0
    %278 = vmatpush1.msra.mxu0 0.0
    %279 = vmatprep.subr.mxu0 0.0
    %280 = vmatpush1.msra.mxu0 0.0
    %281 = vmatprep.subr.mxu0 0.0
    %282 = vmatpush1.msra.mxu0 0.0
    %283 = vmatprep.subr.mxu0 0.0
    %284 = vmatpush1.msra.mxu0 0.0
    %285 = vmatprep.subr.mxu0 0.0
    %286 = vmatpush1.msra.mxu0 0.0
    %287 = vmatprep.subr.mxu0 0.0
    %288 = vmatpush1.msra.mxu0 0.0
    %289 = vmatprep.subr.mxu0 0.0
    %290 = vmatpush1.msra.mxu0 0.0
    %291 = vmatprep.subr.mxu0 0.0
    %292 = vmatpush1.msra.mxu0 0.0
    %293 = vmatprep.subr.mxu0 0.0
    %294 = vmatpush1.msra.mxu0 0.0
    %295 = vmatprep.subr.mxu0 0.0
    %296 = vmatpush1.msra.mxu0 0.0
    %297 = vmatprep.subr.mxu0 0.0
    %298 = vmatpush1.msra.mxu0 0.0
    %299 = vmatprep.subr.mxu0 0.0
    %300 = vmatpush1.msra.mxu0 0.0
    %301 = vmatprep.subr.mxu0 0.0
    %302 = vmatpush1.msra.mxu0 0.0
    %303 = vmatprep.subr.mxu0 0.0
    %304 = vmatpush1.msra.mxu0 0.0
    %305 = vmatprep.subr.mxu0 0.0
    %306 = vmatpush1.msra.mxu0 0.0
    %307 = vmatprep.subr.mxu0 0.0
    %308 = vmatpush1.msra.mxu0 0.0
    %309 = vmatprep.mubr.f32.mxu0 0.0
    %v310 = vand.u32 %v46, 4294901760
    %311 = vmatmul.mubr.f32.gmra.mrb[0].mxu0 %v310
    %v312 = vpop.f32.mrb[0].mxu0
    %v313 = vadd.f32 %v152, %v312
    %v314 = vpop.f32.mrb[0].mxu0
    %315 = vmatprep.mubr.f32.mxu0 0.0
    %v316 = vand.u32 %v47, 4294901760
    %317 = vmatmul.mubr.f32.gmra.mrb[0].mxu0 %v316
    %v318 = vpop.f32.mrb[0].mxu0
    %v319 = vadd.f32 %v162, %v318
    %v320 = vpop.f32.mrb[0].mxu0
    %321 = vdwg.mxu0
    %322 = vmatprep.subr.mxu0 0.0
    %v323 = vand.u32 %v48, 4294901760
    %v324 = vsub.f32 %v48, %v323
    %325 = vmatpush1.msra.mxu0 %v324
    %326 = vmatprep.subr.mxu0 0.0
    %v327 = vand.u32 %v49, 4294901760
    %v328 = vsub.f32 %v49, %v327
    %329 = vmatpush1.msra.mxu0 %v328
    %330 = vmatprep.subr.mxu0 0.0
    %v331 = vand.u32 %v50, 4294901760
    %v332 = vsub.f32 %v50, %v331
    %333 = vmatpush1.msra.mxu0 %v332
    %334 = vmatprep.subr.mxu0 0.0
    %v335 = vand.u32 %v51, 4294901760
    %v336 = vsub.f32 %v51, %v335
    %337 = vmatpush1.msra.mxu0 %v336
    %338 = vmatprep.subr.mxu0 0.0
    %v339 = vand.u32 %v52, 4294901760
    %v340 = vsub.f32 %v52, %v339
    %341 = vmatpush1.msra.mxu0 %v340
    %342 = vmatprep.subr.mxu0 0.0
    %v343 = vand.u32 %v53, 4294901760
    %v344 = vsub.f32 %v53, %v343
    %345 = vmatpush1.msra.mxu0 %v344
    %346 = vmatprep.subr.mxu0 0.0
    %v347 = vand.u32 %v54, 4294901760
    %v348 = vsub.f32 %v54, %v347
    %349 = vmatpush1.msra.mxu0 %v348
    %350 = vmatprep.subr.mxu0 0.0
    %v351 = vand.u32 %v55, 4294901760
    %v352 = vsub.f32 %v55, %v351
    %353 = vmatpush1.msra.mxu0 %v352
    %354 = vmatprep.subr.mxu0 0.0
    %v355 = vand.u32 %v56, 4294901760
    %v356 = vsub.f32 %v56, %v355
    %357 = vmatpush1.msra.mxu0 %v356
    %358 = vmatprep.subr.mxu0 0.0
    %v359 = vand.u32 %v57, 4294901760
    %v360 = vsub.f32 %v57, %v359
    %361 = vmatpush1.msra.mxu0 %v360
    %362 = vmatprep.subr.mxu0 0.0
    %v363 = vand.u32 %v58, 4294901760
    %v364 = vsub.f32 %v58, %v363
    %365 = vmatpush1.msra.mxu0 %v364
    %366 = vmatprep.subr.mxu0 0.0
    %v367 = vand.u32 %v59, 4294901760
    %v368 = vsub.f32 %v59, %v367
    %369 = vmatpush1.msra.mxu0 %v368
    %370 = vmatprep.subr.mxu0 0.0
    %v371 = vand.u32 %v60, 4294901760
    %v372 = vsub.f32 %v60, %v371
    %373 = vmatpush1.msra.mxu0 %v372
    %374 = vmatprep.subr.mxu0 0.0
    %v375 = vand.u32 %v61, 4294901760
    %v376 = vsub.f32 %v61, %v375
    %377 = vmatpush1.msra.mxu0 %v376
    %378 = vmatprep.subr.mxu0 0.0
    %v379 = vand.u32 %v62, 4294901760
    %v380 = vsub.f32 %v62, %v379
    %381 = vmatpush1.msra.mxu0 %v380
    %382 = vmatprep.subr.mxu0 0.0
    %v383 = vand.u32 %v63, 4294901760
    %v384 = vsub.f32 %v63, %v383
    %385 = vmatpush1.msra.mxu0 %v384
    %386 = vmatprep.subr.mxu0 0.0
    %387 = vmatpush1.msra.mxu0 0.0
    %388 = vmatprep.subr.mxu0 0.0
    %389 = vmatpush1.msra.mxu0 0.0
    %390 = vmatprep.subr.mxu0 0.0
    %391 = vmatpush1.msra.mxu0 0.0
    %392 = vmatprep.subr.mxu0 0.0
    %393 = vmatpush1.msra.mxu0 0.0
    %394 = vmatprep.subr.mxu0 0.0
    %395 = vmatpush1.msra.mxu0 0.0
    %396 = vmatprep.subr.mxu0 0.0
    %397 = vmatpush1.msra.mxu0 0.0
    %398 = vmatprep.subr.mxu0 0.0
    %399 = vmatpush1.msra.mxu0 0.0
    %400 = vmatprep.subr.mxu0 0.0
    %401 = vmatpush1.msra.mxu0 0.0
    %402 = vmatprep.subr.mxu0 0.0
    %403 = vmatpush1.msra.mxu0 0.0
    %404 = vmatprep.subr.mxu0 0.0
    %405 = vmatpush1.msra.mxu0 0.0
    %406 = vmatprep.subr.mxu0 0.0
    %407 = vmatpush1.msra.mxu0 0.0
    %408 = vmatprep.subr.mxu0 0.0
    %409 = vmatpush1.msra.mxu0 0.0
    %410 = vmatprep.subr.mxu0 0.0
    %411 = vmatpush1.msra.mxu0 0.0
    %412 = vmatprep.subr.mxu0 0.0
    %413 = vmatpush1.msra.mxu0 0.0
    %414 = vmatprep.subr.mxu0 0.0
    %415 = vmatpush1.msra.mxu0 0.0
    %416 = vmatprep.subr.mxu0 0.0
    %417 = vmatpush1.msra.mxu0 0.0
    %418 = vmatprep.mubr.f32.mxu0 0.0
    %v419 = vand.u32 %v46, 4294901760
    %v420 = vsub.f32 %v46, %v419
    %421 = vmatmul.mubr.f32.gmra.mrb[0].mxu0 %v420
    %v422 = vpop.f32.mrb[0].mxu0
    %v423 = vadd.f32 %v313, %v422
    %v424 = vpop.f32.mrb[0].mxu0
    %425 = vmatprep.mubr.f32.mxu0 0.0
    %v426 = vand.u32 %v47, 4294901760
    %v427 = vsub.f32 %v47, %v426
    %428 = vmatmul.mubr.f32.gmra.mrb[0].mxu0 %v427
    %v429 = vpop.f32.mrb[0].mxu0
    %v430 = vadd.f32 %v319, %v429
    %v431 = vpop.f32.mrb[0].mxu0
    %432 = vdwg.mxu0
    %433 = vmatprep.subr.mxu0 0.0
    %v434 = vand.u32 %v48, 4294901760
    %435 = vmatpush1.msra.mxu0 %v434
    %436 = vmatprep.subr.mxu0 0.0
    %v437 = vand.u32 %v49, 4294901760
    %438 = vmatpush1.msra.mxu0 %v437
    %439 = vmatprep.subr.mxu0 0.0
    %v440 = vand.u32 %v50, 4294901760
    %441 = vmatpush1.msra.mxu0 %v440
    %442 = vmatprep.subr.mxu0 0.0
    %v443 = vand.u32 %v51, 4294901760
    %444 = vmatpush1.msra.mxu0 %v443
    %445 = vmatprep.subr.mxu0 0.0
    %v446 = vand.u32 %v52, 4294901760
    %447 = vmatpush1.msra.mxu0 %v446
    %448 = vmatprep.subr.mxu0 0.0
    %v449 = vand.u32 %v53, 4294901760
    %450 = vmatpush1.msra.mxu0 %v449
    %451 = vmatprep.subr.mxu0 0.0
    %v452 = vand.u32 %v54, 4294901760
    %453 = vmatpush1.msra.mxu0 %v452
    %454 = vmatprep.subr.mxu0 0.0
    %v455 = vand.u32 %v55, 4294901760
    %456 = vmatpush1.msra.mxu0 %v455
    %457 = vmatprep.subr.mxu0 0.0
    %v458 = vand.u32 %v56, 4294901760
    %459 = vmatpush1.msra.mxu0 %v458
    %460 = vmatprep.subr.mxu0 0.0
    %v461 = vand.u32 %v57, 4294901760
    %462 = vmatpush1.msra.mxu0 %v461
    %463 = vmatprep.subr.mxu0 0.0
    %v464 = vand.u32 %v58, 4294901760
    %465 = vmatpush1.msra.mxu0 %v464
    %466 = vmatprep.subr.mxu0 0.0
    %v467 = vand.u32 %v59, 4294901760
    %468 = vmatpush1.msra.mxu0 %v467
    %469 = vmatprep.subr.mxu0 0.0
    %v470 = vand.u32 %v60, 4294901760
    %471 = vmatpush1.msra.mxu0 %v470
    %472 = vmatprep.subr.mxu0 0.0
    %v473 = vand.u32 %v61, 4294901760
    %474 = vmatpush1.msra.mxu0 %v473
    %475 = vmatprep.subr.mxu0 0.0
    %v476 = vand.u32 %v62, 4294901760
    %477 = vmatpush1.msra.mxu0 %v476
    %478 = vmatprep.subr.mxu0 0.0
    %v479 = vand.u32 %v63, 4294901760
    %480 = vmatpush1.msra.mxu0 %v479
    %481 = vmatprep.subr.mxu0 0.0
    %482 = vmatpush1.msra.mxu0 0.0
    %483 = vmatprep.subr.mxu0 0.0
    %484 = vmatpush1.msra.mxu0 0.0
    %485 = vmatprep.subr.mxu0 0.0
    %486 = vmatpush1.msra.mxu0 0.0
    %487 = vmatprep.subr.mxu0 0.0
    %488 = vmatpush1.msra.mxu0 0.0
    %489 = vmatprep.subr.mxu0 0.0
    %490 = vmatpush1.msra.mxu0 0.0
    %491 = vmatprep.subr.mxu0 0.0
    %492 = vmatpush1.msra.mxu0 0.0
    %493 = vmatprep.subr.mxu0 0.0
    %494 = vmatpush1.msra.mxu0 0.0
    %495 = vmatprep.subr.mxu0 0.0
    %496 = vmatpush1.msra.mxu0 0.0
    %497 = vmatprep.subr.mxu0 0.0
    %498 = vmatpush1.msra.mxu0 0.0
    %499 = vmatprep.subr.mxu0 0.0
    %500 = vmatpush1.msra.mxu0 0.0
    %501 = vmatprep.subr.mxu0 0.0
    %502 = vmatpush1.msra.mxu0 0.0
    %503 = vmatprep.subr.mxu0 0.0
    %504 = vmatpush1.msra.mxu0 0.0
    %505 = vmatprep.subr.mxu0 0.0
    %506 = vmatpush1.msra.mxu0 0.0
    %507 = vmatprep.subr.mxu0 0.0
    %508 = vmatpush1.msra.mxu0 0.0
    %509 = vmatprep.subr.mxu0 0.0
    %510 = vmatpush1.msra.mxu0 0.0
    %511 = vmatprep.subr.mxu0 0.0
    %512 = vmatpush1.msra.mxu0 0.0
    %513 = vmatprep.mubr.f32.mxu0 0.0
    %v514 = vand.u32 %v46, 4294901760
    %v515 = vsub.f32 %v46, %v514
    %v516 = vand.u32 %v515, 4294901760
    %517 = vmatmul.mubr.f32.gmra.mrb[0].mxu0 %v516
    %v518 = vpop.f32.mrb[0].mxu0
    %v519 = vadd.f32 %v423, %v518
    %v520 = vpop.f32.mrb[0].mxu0
    %521 = vmatprep.mubr.f32.mxu0 0.0
    %v522 = vand.u32 %v47, 4294901760
    %v523 = vsub.f32 %v47, %v522
    %v524 = vand.u32 %v523, 4294901760
    %525 = vmatmul.mubr.f32.gmra.mrb[0].mxu0 %v524
    %v526 = vpop.f32.mrb[0].mxu0
    %v527 = vadd.f32 %v430, %v526
    %v528 = vpop.f32.mrb[0].mxu0
    %529 = vdwg.mxu0
    %530 = vmatprep.subr.mxu0 0.0
    %v531 = vand.u32 %v48, 4294901760
    %v532 = vsub.f32 %v48, %v531
    %v533 = vand.u32 %v532, 4294901760
    %534 = vmatpush1.msra.mxu0 %v533
    %535 = vmatprep.subr.mxu0 0.0
    %v536 = vand.u32 %v49, 4294901760
    %v537 = vsub.f32 %v49, %v536
    %v538 = vand.u32 %v537, 4294901760
    %539 = vmatpush1.msra.mxu0 %v538
    %540 = vmatprep.subr.mxu0 0.0
    %v541 = vand.u32 %v50, 4294901760
    %v542 = vsub.f32 %v50, %v541
    %v543 = vand.u32 %v542, 4294901760
    %544 = vmatpush1.msra.mxu0 %v543
    %545 = vmatprep.subr.mxu0 0.0
    %v546 = vand.u32 %v51, 4294901760
    %v547 = vsub.f32 %v51, %v546
    %v548 = vand.u32 %v547, 4294901760
    %549 = vmatpush1.msra.mxu0 %v548
    %550 = vmatprep.subr.mxu0 0.0
    %v551 = vand.u32 %v52, 4294901760
    %v552 = vsub.f32 %v52, %v551
    %v553 = vand.u32 %v552, 4294901760
    %554 = vmatpush1.msra.mxu0 %v553
    %555 = vmatprep.subr.mxu0 0.0
    %v556 = vand.u32 %v53, 4294901760
    %v557 = vsub.f32 %v53, %v556
    %v558 = vand.u32 %v557, 4294901760
    %559 = vmatpush1.msra.mxu0 %v558
    %560 = vmatprep.subr.mxu0 0.0
    %v561 = vand.u32 %v54, 4294901760
    %v562 = vsub.f32 %v54, %v561
    %v563 = vand.u32 %v562, 4294901760
    %564 = vmatpush1.msra.mxu0 %v563
    %565 = vmatprep.subr.mxu0 0.0
    %v566 = vand.u32 %v55, 4294901760
    %v567 = vsub.f32 %v55, %v566
    %v568 = vand.u32 %v567, 4294901760
    %569 = vmatpush1.msra.mxu0 %v568
    %570 = vmatprep.subr.mxu0 0.0
    %v571 = vand.u32 %v56, 4294901760
    %v572 = vsub.f32 %v56, %v571
    %v573 = vand.u32 %v572, 4294901760
    %574 = vmatpush1.msra.mxu0 %v573
    %575 = vmatprep.subr.mxu0 0.0
    %v576 = vand.u32 %v57, 4294901760
    %v577 = vsub.f32 %v57, %v576
    %v578 = vand.u32 %v577, 4294901760
    %579 = vmatpush1.msra.mxu0 %v578
    %580 = vmatprep.subr.mxu0 0.0
    %v581 = vand.u32 %v58, 4294901760
    %v582 = vsub.f32 %v58, %v581
    %v583 = vand.u32 %v582, 4294901760
    %584 = vmatpush1.msra.mxu0 %v583
    %585 = vmatprep.subr.mxu0 0.0
    %v586 = vand.u32 %v59, 4294901760
    %v587 = vsub.f32 %v59, %v586
    %v588 = vand.u32 %v587, 4294901760
    %589 = vmatpush1.msra.mxu0 %v588
    %590 = vmatprep.subr.mxu0 0.0
    %v591 = vand.u32 %v60, 4294901760
    %v592 = vsub.f32 %v60, %v591
    %v593 = vand.u32 %v592, 4294901760
    %594 = vmatpush1.msra.mxu0 %v593
    %595 = vmatprep.subr.mxu0 0.0
    %v596 = vand.u32 %v61, 4294901760
    %v597 = vsub.f32 %v61, %v596
    %v598 = vand.u32 %v597, 4294901760
    %599 = vmatpush1.msra.mxu0 %v598
    %600 = vmatprep.subr.mxu0 0.0
    %v601 = vand.u32 %v62, 4294901760
    %v602 = vsub.f32 %v62, %v601
    %v603 = vand.u32 %v602, 4294901760
    %604 = vmatpush1.msra.mxu0 %v603
    %605 = vmatprep.subr.mxu0 0.0
    %v606 = vand.u32 %v63, 4294901760
    %v607 = vsub.f32 %v63, %v606
    %v608 = vand.u32 %v607, 4294901760
    %609 = vmatpush1.msra.mxu0 %v608
    %610 = vmatprep.subr.mxu0 0.0
    %611 = vmatpush1.msra.mxu0 0.0
    %612 = vmatprep.subr.mxu0 0.0
    %613 = vmatpush1.msra.mxu0 0.0
    %614 = vmatprep.subr.mxu0 0.0
    %615 = vmatpush1.msra.mxu0 0.0
    %616 = vmatprep.subr.mxu0 0.0
    %617 = vmatpush1.msra.mxu0 0.0
    %618 = vmatprep.subr.mxu0 0.0
    %619 = vmatpush1.msra.mxu0 0.0
    %620 = vmatprep.subr.mxu0 0.0
    %621 = vmatpush1.msra.mxu0 0.0
    %622 = vmatprep.subr.mxu0 0.0
    %623 = vmatpush1.msra.mxu0 0.0
    %624 = vmatprep.subr.mxu0 0.0
    %625 = vmatpush1.msra.mxu0 0.0
    %626 = vmatprep.subr.mxu0 0.0
    %627 = vmatpush1.msra.mxu0 0.0
    %628 = vmatprep.subr.mxu0 0.0
    %629 = vmatpush1.msra.mxu0 0.0
    %630 = vmatprep.subr.mxu0 0.0
    %631 = vmatpush1.msra.mxu0 0.0
    %632 = vmatprep.subr.mxu0 0.0
    %633 = vmatpush1.msra.mxu0 0.0
    %634 = vmatprep.subr.mxu0 0.0
    %635 = vmatpush1.msra.mxu0 0.0
    %636 = vmatprep.subr.mxu0 0.0
    %637 = vmatpush1.msra.mxu0 0.0
    %638 = vmatprep.subr.mxu0 0.0
    %639 = vmatpush1.msra.mxu0 0.0
    %640 = vmatprep.subr.mxu0 0.0
    %641 = vmatpush1.msra.mxu0 0.0
    %642 = vmatprep.mubr.f32.mxu0 0.0
    %v643 = vand.u32 %v46, 4294901760
    %644 = vmatmul.mubr.f32.gmra.mrb[0].mxu0 %v643
    %v645 = vpop.f32.mrb[0].mxu0
    %v646 = vadd.f32 %v519, %v645
    %v647 = vpop.f32.mrb[0].mxu0
    %648 = vmatprep.mubr.f32.mxu0 0.0
    %v649 = vand.u32 %v47, 4294901760
    %650 = vmatmul.mubr.f32.gmra.mrb[0].mxu0 %v649
    %v651 = vpop.f32.mrb[0].mxu0
    %v652 = vadd.f32 %v527, %v651
    %v653 = vpop.f32.mrb[0].mxu0
    %654 = vdwg.mxu0
    %655 = vmatprep.subr.mxu0 0.0
    %v656 = vand.u32 %v48, 4294901760
    %657 = vmatpush1.msra.mxu0 %v656
    %658 = vmatprep.subr.mxu0 0.0
    %v659 = vand.u32 %v49, 4294901760
    %660 = vmatpush1.msra.mxu0 %v659
    %661 = vmatprep.subr.mxu0 0.0
    %v662 = vand.u32 %v50, 4294901760
    %663 = vmatpush1.msra.mxu0 %v662
    %664 = vmatprep.subr.mxu0 0.0
    %v665 = vand.u32 %v51, 4294901760
    %666 = vmatpush1.msra.mxu0 %v665
    %667 = vmatprep.subr.mxu0 0.0
    %v668 = vand.u32 %v52, 4294901760
    %669 = vmatpush1.msra.mxu0 %v668
    %670 = vmatprep.subr.mxu0 0.0
    %v671 = vand.u32 %v53, 4294901760
    %672 = vmatpush1.msra.mxu0 %v671
    %673 = vmatprep.subr.mxu0 0.0
    %v674 = vand.u32 %v54, 4294901760
    %675 = vmatpush1.msra.mxu0 %v674
    %676 = vmatprep.subr.mxu0 0.0
    %v677 = vand.u32 %v55, 4294901760
    %678 = vmatpush1.msra.mxu0 %v677
    %679 = vmatprep.subr.mxu0 0.0
    %v680 = vand.u32 %v56, 4294901760
    %681 = vmatpush1.msra.mxu0 %v680
    %682 = vmatprep.subr.mxu0 0.0
    %v683 = vand.u32 %v57, 4294901760
    %684 = vmatpush1.msra.mxu0 %v683
    %685 = vmatprep.subr.mxu0 0.0
    %v686 = vand.u32 %v58, 4294901760
    %687 = vmatpush1.msra.mxu0 %v686
    %688 = vmatprep.subr.mxu0 0.0
    %v689 = vand.u32 %v59, 4294901760
    %690 = vmatpush1.msra.mxu0 %v689
    %691 = vmatprep.subr.mxu0 0.0
    %v692 = vand.u32 %v60, 4294901760
    %693 = vmatpush1.msra.mxu0 %v692
    %694 = vmatprep.subr.mxu0 0.0
    %v695 = vand.u32 %v61, 4294901760
    %696 = vmatpush1.msra.mxu0 %v695
    %697 = vmatprep.subr.mxu0 0.0
    %v698 = vand.u32 %v62, 4294901760
    %699 = vmatpush1.msra.mxu0 %v698
    %700 = vmatprep.subr.mxu0 0.0
    %v701 = vand.u32 %v63, 4294901760
    %702 = vmatpush1.msra.mxu0 %v701
    %703 = vmatprep.subr.mxu0 0.0
    %704 = vmatpush1.msra.mxu0 0.0
    %705 = vmatprep.subr.mxu0 0.0
    %706 = vmatpush1.msra.mxu0 0.0
    %707 = vmatprep.subr.mxu0 0.0
    %708 = vmatpush1.msra.mxu0 0.0
    %709 = vmatprep.subr.mxu0 0.0
    %710 = vmatpush1.msra.mxu0 0.0
    %711 = vmatprep.subr.mxu0 0.0
    %712 = vmatpush1.msra.mxu0 0.0
    %713 = vmatprep.subr.mxu0 0.0
    %714 = vmatpush1.msra.mxu0 0.0
    %715 = vmatprep.subr.mxu0 0.0
    %716 = vmatpush1.msra.mxu0 0.0
    %717 = vmatprep.subr.mxu0 0.0
    %718 = vmatpush1.msra.mxu0 0.0
    %719 = vmatprep.subr.mxu0 0.0
    %720 = vmatpush1.msra.mxu0 0.0
    %721 = vmatprep.subr.mxu0 0.0
    %722 = vmatpush1.msra.mxu0 0.0
    %723 = vmatprep.subr.mxu0 0.0
    %724 = vmatpush1.msra.mxu0 0.0
    %725 = vmatprep.subr.mxu0 0.0
    %726 = vmatpush1.msra.mxu0 0.0
    %727 = vmatprep.subr.mxu0 0.0
    %728 = vmatpush1.msra.mxu0 0.0
    %729 = vmatprep.subr.mxu0 0.0
    %730 = vmatpush1.msra.mxu0 0.0
    %731 = vmatprep.subr.mxu0 0.0
    %732 = vmatpush1.msra.mxu0 0.0
    %733 = vmatprep.subr.mxu0 0.0
    %734 = vmatpush1.msra.mxu0 0.0
    %735 = vmatprep.mubr.f32.mxu0 0.0
    %v736 = vand.u32 %v46, 4294901760
    %737 = vmatmul.mubr.f32.gmra.mrb[0].mxu0 %v736
    %v738 = vpop.f32.mrb[0].mxu0
    %v739 = vadd.f32 %v646, %v738
    %v740 = vpop.f32.mrb[0].mxu0
    %741 = vmatprep.mubr.f32.mxu0 0.0
    %v742 = vand.u32 %v47, 4294901760
    %743 = vmatmul.mubr.f32.gmra.mrb[0].mxu0 %v742
    %v744 = vpop.f32.mrb[0].mxu0
    %v745 = vadd.f32 %v652, %v744
    %v746 = vpop.f32.mrb[0].mxu0
    %747 = vdwg.mxu0
    %748 = vst [vmem:[#allocation5] sm:$0xff] %v739
    %749 = vst [vmem:[#allocation5 + $0x8] sm:$0xff] %v745
    // Predicated region
    $region18: #{tpu_custom_call.1} parent=1 // pred_check
      _
    $region19: #{tpu_custom_call.1} parent=1 // pred_check_branch
      %751 = sbr.rel (0) target = $region21
    $region20: #{tpu_custom_call.1} parent=1 // pred_region
      %s753 = ssub.s32 256, 256
      %754 = vsyncadd [#allocation4], %s753
      %s755 = sshll.u32 [#allocation5], 4
      %s756 = int_to_ptr.vmem [resolvable:$true] %s755
      %761 = dma.vmem_to_hbm [thread:$0]  %s756, 256, %s3, [#allocation4], 128, 128, 8
    $region21: #{tpu_custom_call.1} parent=1 // pred_fallthru
      _
    // Predicated region
    $region22: #{tpu_custom_call.1} parent=1 // pred_check
      _
    $region23: #{tpu_custom_call.1} parent=1 // pred_check_branch
      %763 = sbr.rel (0) target = $region25
    $region24: #{tpu_custom_call.1} parent=1 // pred_region
      %764 = dma.done [#allocation4], 256
    $region25: #{tpu_custom_call.1} parent=1 // pred_fallthru
      _
    %765 = vsyncpa [#allocation3], 1
    %766 = vsyncpa [#allocation4], 1

</llo_original>
